<compile_context>
chip_gen: v7x
topology: tpu7x:2x2x1
jax: 0.10.0
libtpu: 0.0.40
codegen_flags: <defaults>
</compile_context>

<pallas_src>
import functools

import numpy as np
import jax
import jax.numpy as jnp
from jax.experimental import pallas as pl
from jax.experimental.pallas import tpu as pltpu


def _round_up(x, m):
    return ((x + m - 1) // m) * m


@functools.lru_cache(maxsize=1)
def _chip_info():
    """(is_v7x, num_tensorcores, scoped VMEM limit) for the local device."""
    kind = ""
    try:
        kind = jax.devices()[0].device_kind.lower()
    except Exception:
        pass
    is_v7 = ("v7" in kind) or ("7x" in kind)
    num_tc = 2 if is_v7 else 1
    # v7x: 64 MiB physical VMEM per TC -> request 48 MiB, leave Mosaic headroom.
    # v5e/v6e: 128 MiB physical -> raise well above the 16/32 MiB default.
    vmem_limit = (48 if is_v7 else 96) * 1024 * 1024
    return is_v7, num_tc, vmem_limit


def _choose_row_tile(n_rows, cap=512):
    """Largest multiple-of-8 row tile <= cap, preferring one that divides
    n_rows (avoids a pad copy on the input and a re-slice of the output)."""
    cap = max(8, (cap // 8) * 8)
    target = min(cap, _round_up(max(n_rows, 1), 8))
    if n_rows > 0 and n_rows % 8 == 0:
        for t in range(min(cap, n_rows), max(target // 4, 8) - 1, -8):
            if n_rows % t == 0:
                return t
    return target


# ----------------------------------------------------------------------------
# Kernel 1: covariance  cov = X^T X / N
# ----------------------------------------------------------------------------
def _cov_square_kernel(x_ref, out_ref, acc_ref, *, compute_dtype, inv_n,
                       reduce_axis):
    s = pl.program_id(reduce_axis)

    @pl.when(s == 0)
    def _():
        acc_ref[...] = jnp.zeros_like(acc_ref)

    x = x_ref[...].astype(compute_dtype)
    # Contract over the row (token) axis directly -- no explicit transpose.
    acc_ref[...] += jax.lax.dot_general(
        x, x, dimension_numbers=(((0,), (0,)), ((), ())),
        preferred_element_type=jnp.float32)

    @pl.when(s == pl.num_programs(reduce_axis) - 1)
    def _():
        out_ref[...] = acc_ref[...] * inv_n     # /N folded into the writeback


def _cov_tri_kernel(i_arr_ref, j_arr_ref, xi_ref, xj_ref, out_ref, acc_ref, *,
                    compute_dtype, inv_n):
    del i_arr_ref, j_arr_ref                    # only used by the index_maps
    s = pl.program_id(1)

    @pl.when(s == 0)
    def _():
        acc_ref[...] = jnp.zeros_like(acc_ref)

    xi = xi_ref[...].astype(compute_dtype)
    xj = xj_ref[...].astype(compute_dtype)
    acc_ref[...] += jax.lax.dot_general(
        xi, xj, dimension_numbers=(((0,), (0,)), ((), ())),
        preferred_element_type=jnp.float32)

    @pl.when(s == pl.num_programs(1) - 1)
    def _():
        out_ref[...] = acc_ref[...] * inv_n


def compute_covariance(x_flat, *, row_tile=None, col_tile=None,
                       num_partials=None, compute_dtype=jnp.float32):
    """cov = X^T X / N with the /N folded into the kernel writeback."""
    n, h = x_flat.shape
    _, num_tc, vmem_limit = _chip_info()

    if col_tile is None:
        if h > 512 and h % 128 == 0:
            col_tile = 512 if h % 512 == 0 else (256 if h % 256 == 0 else 128)
        else:
            col_tile = h
    tiled = (col_tile != h)
    if tiled and h % col_tile != 0:
        col_tile, tiled = h, False

    if row_tile is None:
        row_tile = _choose_row_tile(n, cap=512)

    if num_partials is None:
        num_partials = 2 if num_tc > 1 else 1   # partials only help multi-TC

    inv_n = 1.0 / float(n)

    if not tiled:
        total_blocks = pl.cdiv(n, row_tile)
        parts = num_partials if (num_partials > 1 and
                                 total_blocks >= num_partials) else 1
        steps = pl.cdiv(total_blocks, parts)
        n_pad = parts * steps * row_tile
        x_p = jnp.pad(x_flat, ((0, n_pad - n), (0, 0))) if n_pad != n else x_flat

        if parts == 1:
            return pl.pallas_call(
                functools.partial(_cov_square_kernel,
                                  compute_dtype=compute_dtype, inv_n=inv_n,
                                  reduce_axis=0),
                out_shape=jax.ShapeDtypeStruct((h, h), jnp.float32),
                grid_spec=pltpu.PrefetchScalarGridSpec(
                    num_scalar_prefetch=0, grid=(steps,),
                    in_specs=[pl.BlockSpec((row_tile, h), lambda s: (s, 0))],
                    out_specs=pl.BlockSpec((h, h), lambda s: (0, 0)),
                    scratch_shapes=[pltpu.VMEM((h, h), jnp.float32)]),
                compiler_params=pltpu.CompilerParams(
                    dimension_semantics=("arbitrary",),
                    vmem_limit_bytes=vmem_limit),
            )(x_p)

        partials = pl.pallas_call(
            functools.partial(_cov_square_kernel, compute_dtype=compute_dtype,
                              inv_n=inv_n, reduce_axis=1),
            out_shape=jax.ShapeDtypeStruct((parts, h, h), jnp.float32),
            grid_spec=pltpu.PrefetchScalarGridSpec(
                num_scalar_prefetch=0, grid=(parts, steps),
                in_specs=[pl.BlockSpec((row_tile, h),
                                       lambda p, s: (p * steps + s, 0))],
                out_specs=pl.BlockSpec((None, h, h), lambda p, s: (p, 0, 0)),
                scratch_shapes=[pltpu.VMEM((h, h), jnp.float32)]),
            compiler_params=pltpu.CompilerParams(
                dimension_semantics=("parallel", "arbitrary"),
                vmem_limit_bytes=vmem_limit),
        )(x_p)
        return jnp.sum(partials, axis=0)

    # Tiled path: only the upper-triangular output tiles are computed
    # (symmetry of X^T X), and the lower tiles are mirrored in JAX.
    nt = h // col_tile
    steps = pl.cdiv(n, row_tile)
    n_pad = steps * row_tile
    x_p = jnp.pad(x_flat, ((0, n_pad - n), (0, 0))) if n_pad != n else x_flat
    if x_p.dtype != compute_dtype:
        # X is re-read ~nt times in this branch; one-time staging cast amortizes.
        x_p = x_p.astype(compute_dtype)

    pairs = [(i, j) for i in range(nt) for j in range(i, nt)]
    i_arr = jnp.asarray([p[0] for p in pairs], jnp.int32)
    j_arr = jnp.asarray([p[1] for p in pairs], jnp.int32)

    out = pl.pallas_call(
        functools.partial(_cov_tri_kernel, compute_dtype=compute_dtype,
                          inv_n=inv_n),
        out_shape=jax.ShapeDtypeStruct((h, h), jnp.float32),
        grid_spec=pltpu.PrefetchScalarGridSpec(
            num_scalar_prefetch=2, grid=(len(pairs), steps),
            in_specs=[
                pl.BlockSpec((row_tile, col_tile),
                             lambda t, s, ia, ja: (s, ia[t])),
                pl.BlockSpec((row_tile, col_tile),
                             lambda t, s, ia, ja: (s, ja[t])),
            ],
            out_specs=pl.BlockSpec((col_tile, col_tile),
                                   lambda t, s, ia, ja: (ia[t], ja[t])),
            scratch_shapes=[pltpu.VMEM((col_tile, col_tile), jnp.float32)]),
        compiler_params=pltpu.CompilerParams(
            dimension_semantics=("arbitrary", "arbitrary"),
            vmem_limit_bytes=vmem_limit),
    )(i_arr, j_arr, x_p, x_p)

    tile_of = jnp.arange(h, dtype=jnp.int32) // col_tile
    upper = tile_of[:, None] <= tile_of[None, :]
    return jnp.where(upper, out, out.T)         # mirror into unwritten tiles


# ----------------------------------------------------------------------------
# Kernel 2: project -> rank-mask+relu -> reconstruct (one path per call)
#   grid = (row_tiles, output_h_tiles); adaptive rank via scalar prefetch.
# ----------------------------------------------------------------------------
def _compress_kernel(rank_ref, x_ref, wp_ref, bp_ref, wr_ref, br_ref, o_ref,
                     h_scr, *, compute_dtype):
    j = pl.program_id(1)                         # output-H tile (innermost)

    @pl.when(j == 0)
    def _():
        # Projection computed once per row tile, reused across all H tiles.
        x = x_ref[...].astype(compute_dtype)
        wp = wp_ref[...].astype(compute_dtype)
        h = jnp.dot(x, wp, preferred_element_type=jnp.float32) + bp_ref[...]
        # slice + zero-pad + relu  ==  relu then multiply by a (1, R) lane mask
        col = jax.lax.broadcasted_iota(jnp.int32, (1, h.shape[1]), 1)
        keep = (col < rank_ref[0]).astype(jnp.float32)
        h_scr[...] = (jnp.maximum(h, 0.0) * keep).astype(h_scr.dtype)

    wr = wr_ref[...].astype(compute_dtype)
    y = jnp.dot(h_scr[...], wr, preferred_element_type=jnp.float32) + br_ref[...]
    o_ref[...] = y.astype(o_ref.dtype)


def _choose_h_tile(hdim, rank_p, compute_dtype, vmem_limit):
    """Tile the reconstruct matmul over output-H only when the resident
    weights (full Wp + one Wr tile) would not fit comfortably in VMEM."""
    if hdim % 128 != 0:
        return hdim
    itemsize = np.dtype(compute_dtype).itemsize
    budget = vmem_limit // 2
    for cand in (hdim, 2048, 1024, 512, 256, 128):
        if cand > hdim or hdim % cand != 0:
            continue
        if (hdim * rank_p + rank_p * cand) * itemsize <= budget:
            return cand
    return 128


def compress_one_path(x_flat, wp, bp, wr, br, adaptive_rank, *, row_tile=None,
                      h_tile=None, compute_dtype=jnp.bfloat16):
    """x_flat: (N, H); wp: (H, Rp); bp: (1, Rp); wr: (Rp, H); br: (1, H)."""
    n, hdim = x_flat.shape
    rank_p = wp.shape[1]
    assert wp.shape[0] == hdim and wr.shape == (rank_p, hdim)
    is_v7, _, vmem_limit = _chip_info()

    if row_tile is None:
        itemsize = np.dtype(compute_dtype).itemsize
        big_weights = 2 * hdim * rank_p * itemsize >= (16 << 20)
        row_tile = _choose_row_tile(n, cap=256 if (is_v7 and big_weights) else 512)
    n_pad = _round_up(n, row_tile)
    x_p = jnp.pad(x_flat, ((0, n_pad - n), (0, 0))) if n_pad != n else x_flat

    if h_tile is None:
        h_tile = _choose_h_tile(hdim, rank_p, compute_dtype, vmem_limit)
    assert hdim % h_tile == 0
    n_h_tiles = hdim // h_tile

    rank_arr = jnp.asarray(adaptive_rank, dtype=jnp.int32).reshape((1,))

    # Resident operands single-buffered (their block index never changes with
    # the row axis); Wr/br also resident when the output-H axis is untiled.
    wp_spec = pl.BlockSpec((hdim, rank_p), lambda i, j, rk: (0, 0),
                           pipeline_mode=pl.Buffered(1))
    bp_spec = pl.BlockSpec((1, rank_p), lambda i, j, rk: (0, 0),
                           pipeline_mode=pl.Buffered(1))
    if n_h_tiles == 1:
        wr_spec = pl.BlockSpec((rank_p, h_tile), lambda i, j, rk: (0, j),
                               pipeline_mode=pl.Buffered(1))
        br_spec = pl.BlockSpec((1, h_tile), lambda i, j, rk: (0, j),
                               pipeline_mode=pl.Buffered(1))
    else:
        wr_spec = pl.BlockSpec((rank_p, h_tile), lambda i, j, rk: (0, j))
        br_spec = pl.BlockSpec((1, h_tile), lambda i, j, rk: (0, j))

    out = pl.pallas_call(
        functools.partial(_compress_kernel, compute_dtype=compute_dtype),
        out_shape=jax.ShapeDtypeStruct((n_pad, hdim), x_flat.dtype),
        grid_spec=pltpu.PrefetchScalarGridSpec(
            num_scalar_prefetch=1,
            grid=(n_pad // row_tile, n_h_tiles),
            in_specs=[
                pl.BlockSpec((row_tile, hdim), lambda i, j, rk: (i, 0)),
                wp_spec, bp_spec, wr_spec, br_spec,
            ],
            out_specs=pl.BlockSpec((row_tile, h_tile), lambda i, j, rk: (i, j)),
            scratch_shapes=[pltpu.VMEM((row_tile, rank_p), compute_dtype)],
        ),
        compiler_params=pltpu.CompilerParams(
            dimension_semantics=("parallel", "arbitrary"),
            vmem_limit_bytes=vmem_limit),
    )(rank_arr, x_p, wp, bp, wr, br)

    return out[:n] if n_pad != n else out


# ----------------------------------------------------------------------------
# Glue: adaptive rank from the covariance eigen-spectrum (plain JAX eigh)
# ----------------------------------------------------------------------------
def compute_adaptive_rank(keys_flat, energy_threshold, *,
                          cov_dtype=jnp.float32):
    cov = compute_covariance(keys_flat, compute_dtype=cov_dtype)
    eigvals = jnp.linalg.eigh(cov)[0][::-1]                   # descending
    eigvals = jnp.maximum(eigvals, 0.0)                       # clamp negatives
    total = jnp.sum(eigvals)
    ratios = jnp.cumsum(eigvals) / jnp.maximum(total, 1e-12)  # NaN guard
    preserved = ratios < energy_threshold
    eff = jnp.where(jnp.any(preserved), jnp.sum(preserved) + 1, 1)
    return jnp.maximum(eff, 1).astype(jnp.int32)


# ----------------------------------------------------------------------------
# SVDCompressor parameters + forward
# ----------------------------------------------------------------------------
def _orthogonal(key, out_dim, in_dim):
    """Deterministic orthogonal init matching nn.init.orthogonal_ semantics."""
    big, small = max(out_dim, in_dim), min(out_dim, in_dim)
    a = jax.random.normal(key, (big, small), dtype=jnp.float32)
    q, rmat = jnp.linalg.qr(a)
    q = q * jnp.sign(jnp.diag(rmat))[None, :]
    return q if out_dim >= in_dim else q.T      # (out_dim, in_dim)


def init_svd_compressor_params(key, hidden_size, rank, *,
                               param_dtype=jnp.float32, lane_pad=128):
    """Weights stored pre-transposed for the kernel matmuls, rank-padded to a
    lane multiple (zero pad -> exact), biases pre-reshaped to (1, dim)."""
    rank_p = _round_up(rank, lane_pad)
    k1, k2, k3, k4 = jax.random.split(key, 4)

    def proj_w(k):    # (H, rank_p): padded columns are zero
        w = _orthogonal(k, rank, hidden_size).T
        return jnp.pad(w, ((0, 0), (0, rank_p - rank))).astype(param_dtype)

    def recon_w(k):   # (rank_p, H): padded rows are zero (exact reconstruction)
        w = _orthogonal(k, hidden_size, rank).T
        return jnp.pad(w, ((0, rank_p - rank), (0, 0))).astype(param_dtype)

    return {
        "kp_w": proj_w(k1), "kp_b": jnp.zeros((1, rank_p), jnp.float32),
        "kr_w": recon_w(k2), "kr_b": jnp.zeros((1, hidden_size), jnp.float32),
        "vp_w": proj_w(k3), "vp_b": jnp.zeros((1, rank_p), jnp.float32),
        "vr_w": recon_w(k4), "vr_b": jnp.zeros((1, hidden_size), jnp.float32),
        "rank": rank, "rank_padded": rank_p,
    }


def cast_compressor_params(params, compute_dtype):
    """One-time weight cast to the kernel compute dtype (hoisted out of the
    forward path per the performance review)."""
    out = dict(params)
    for name in ("kp_w", "kr_w", "vp_w", "vr_w"):
        out[name] = params[name].astype(compute_dtype)
    return out


def svd_compressor_forward(params, keys, values, *, energy_threshold=0.95,
                           adaptive=True, rank=None,
                           compute_dtype=jnp.bfloat16,
                           cov_dtype=jnp.float32):
    b, s, h = keys.shape
    kf = keys.reshape(b * s, h)
    vf = values.reshape(b * s, h)

    if adaptive:
        adaptive_rank = compute_adaptive_rank(kf, energy_threshold,
                                              cov_dtype=cov_dtype)
    else:
        adaptive_rank = jnp.asarray(
            rank if rank is not None else params["rank"], jnp.int32)

    # One pallas_call per path directly on kf / vf (no stacking copy).
    rec_k = compress_one_path(kf, params["kp_w"], params["kp_b"],
                              params["kr_w"], params["kr_b"], adaptive_rank,
                              compute_dtype=compute_dtype)
    rec_v = compress_one_path(vf, params["vp_w"], params["vp_b"],
                              params["vr_w"], params["vr_b"], adaptive_rank,
                              compute_dtype=compute_dtype)
    return rec_k.reshape(b, s, h), rec_v.reshape(b, s, h), adaptive_rank


# ----------------------------------------------------------------------------
# Reference (plain JAX) for validation
# ----------------------------------------------------------------------------
def _ref_forward(params, keys, values, adaptive_rank):
    hi = jax.lax.Precision.HIGHEST

    def path(x, wp, bp, wr, br):
        h = jnp.einsum("bsh,hr->bsr", x, wp.astype(jnp.float32),
                       precision=hi) + bp
        col = jnp.arange(h.shape[-1])
        h = jnp.where(col < adaptive_rank, jnp.maximum(h, 0.0), 0.0)
        return jnp.einsum("bsr,rh->bsh", h, wr.astype(jnp.float32),
                          precision=hi) + br

    rk = path(keys, params["kp_w"], params["kp_b"], params["kr_w"], params["kr_b"])
    rv = path(values, params["vp_w"], params["vp_b"], params["vr_w"], params["vr_b"])
    return rk, rv


if __name__ == "__main__":
    B, S, H = 2, 8, 32
    compression_ratio = 0.5
    RANK = int(H * compression_ratio)    # 16 (lane-padded to 128 internally)

    root = jax.random.PRNGKey(0)
    kparam, kk, kv, kc = jax.random.split(root, 4)
    params_f32 = init_svd_compressor_params(kparam, H, RANK)
    params_bf16 = cast_compressor_params(params_f32, jnp.bfloat16)  # hoisted
    keys = jax.random.normal(kk, (B, S, H), dtype=jnp.float32)
    values = jax.random.normal(kv, (B, S, H), dtype=jnp.float32)

    # Default path: bf16 MXU inputs (f32 accumulation), f32 covariance rank.
    rec_k, rec_v, arank = svd_compressor_forward(params_bf16, keys, values)
    jax.block_until_ready((rec_k, rec_v, arank))

    ref_k, ref_v = _ref_forward(params_f32, keys, values, arank)
    assert rec_k.shape == (B, S, H) and rec_v.shape == (B, S, H)
    assert bool(jnp.all(jnp.isfinite(rec_k))) and bool(jnp.all(jnp.isfinite(rec_v)))
    assert jnp.allclose(rec_k, ref_k, atol=1e-1, rtol=1e-1)
    assert jnp.allclose(rec_v, ref_v, atol=1e-1, rtol=1e-1)

    # Full-precision kernel path (fixed rank) must match the reference tightly.
    rk32, rv32, _ = svd_compressor_forward(
        params_f32, keys, values, adaptive=False, rank=int(arank),
        compute_dtype=jnp.float32)
    jax.block_until_ready((rk32, rv32))
    assert jnp.allclose(rk32, ref_k, atol=2e-3, rtol=2e-3)
    assert jnp.allclose(rv32, ref_v, atol=2e-3, rtol=2e-3)

    # Exercise the tiled (upper-triangular) covariance path.
    kc1, kc2 = jax.random.split(kc)
    xc = jax.random.normal(kc1, (96, 256), jnp.float32)
    cov_t = compute_covariance(xc, col_tile=128)
    cov_ref = jnp.einsum("nh,nk->hk", xc, xc,
                         precision=jax.lax.Precision.HIGHEST) / 96.0
    jax.block_until_ready(cov_t)
    assert jnp.allclose(cov_t, cov_ref, atol=2e-2, rtol=2e-2)

    # Exercise the partial-sum (multi-TensorCore) covariance path.
    xc2 = jax.random.normal(kc2, (64, 128), jnp.float32)
    cov_p = compute_covariance(xc2, num_partials=2, row_tile=16)
    cov_ref2 = jnp.einsum("nh,nk->hk", xc2, xc2,
                          precision=jax.lax.Precision.HIGHEST) / 64.0
    jax.block_until_ready(cov_p)
    assert jnp.allclose(cov_p, cov_ref2, atol=2e-2, rtol=2e-2)

    print("KERNEL_OK")
</pallas_src>

<mosaic_0001>
module attributes {stable_mosaic.version = 11 : i64} {
  func.func @_cov_square_kernel(%arg0: i32, %arg1: memref<16x32xf32, #tpu.memory_space<vmem>>, %arg2: memref<32x32xf32, #tpu.memory_space<vmem>>, %arg3: memref<32x32xf32, #tpu.memory_space<vmem>>) attributes {dimension_semantics = [#tpu.dimension_semantics<arbitrary>], iteration_bounds = array<i64: 1>, scalar_prefetch = 0 : i64, scratch_operands = 1 : i64, tpu.core_type = #tpu.core_type<tc>, window_params = [{transform_indices = @transform_0, window_bounds = array<i64: 16, 32>}, {pipeline_mode = #tpu.pipeline_mode<synchronous>, transform_indices = @transform_1, window_bounds = array<i64: 32, 32>}]} {
    %c0_i32 = arith.constant 0 : i32
    %0 = arith.cmpi eq, %arg0, %c0_i32 : i32
    %1 = arith.extui %0 : i1 to i32
    %c0_i32_0 = arith.constant 0 : i32
    %2 = arith.cmpi ne, %1, %c0_i32_0 : i32
    scf.if %2 {
      %cst_8 = arith.constant 0.000000e+00 : f32
      %11 = vector.broadcast %cst_8 : f32 to vector<32x32xf32>
      %c0_9 = arith.constant 0 : index
      %c0_10 = arith.constant 0 : index
      %12 = vector.load %arg3[%c0_9, %c0_10] : memref<32x32xf32, #tpu.memory_space<vmem>>, vector<32x32xf32>
      tpu.vector_store %arg3[%c0_9, %c0_10], %11 {strides = array<i32>} : memref<32x32xf32, #tpu.memory_space<vmem>>, vector<32x32xf32>,
    } else {
    }
    %c0 = arith.constant 0 : index
    %c0_1 = arith.constant 0 : index
    %3 = vector.load %arg1[%c0, %c0_1] : memref<16x32xf32, #tpu.memory_space<vmem>>, vector<16x32xf32>
    %c0_2 = arith.constant 0 : index
    %c0_3 = arith.constant 0 : index
    %4 = vector.load %arg3[%c0_2, %c0_3] : memref<32x32xf32, #tpu.memory_space<vmem>>, vector<32x32xf32>
    %cst = arith.constant dense<0.000000e+00> : vector<32x32xf32>
    %5 = tpu.matmul %3, %3, %cst {dimension_numbers = #tpu.dot_dimension_numbers<[0], [0], [1], [1], [0, 1, 1, 1], [], []>} : vector<16x32xf32>, vector<16x32xf32>, vector<32x32xf32> -> vector<32x32xf32>
    %6 = arith.addf %4, %5 : vector<32x32xf32>
    %c0_4 = arith.constant 0 : index
    %c0_5 = arith.constant 0 : index
    %7 = vector.load %arg3[%c0_4, %c0_5] : memref<32x32xf32, #tpu.memory_space<vmem>>, vector<32x32xf32>
    tpu.vector_store %arg3[%c0_4, %c0_5], %6 {strides = array<i32>} : memref<32x32xf32, #tpu.memory_space<vmem>>, vector<32x32xf32>,
    %c0_i32_6 = arith.constant 0 : i32
    %8 = arith.cmpi eq, %arg0, %c0_i32_6 : i32
    %9 = arith.extui %8 : i1 to i32
    %c0_i32_7 = arith.constant 0 : i32
    %10 = arith.cmpi ne, %9, %c0_i32_7 : i32
    scf.if %10 {
      %c0_8 = arith.constant 0 : index
      %c0_9 = arith.constant 0 : index
      %11 = vector.load %arg3[%c0_8, %c0_9] : memref<32x32xf32, #tpu.memory_space<vmem>>, vector<32x32xf32>
      %cst_10 = arith.constant 6.250000e-02 : f32
      %12 = vector.broadcast %cst_10 : f32 to vector<32x32xf32>
      %13 = arith.mulf %11, %12 : vector<32x32xf32>
      %c0_11 = arith.constant 0 : index
      %c0_12 = arith.constant 0 : index
      %14 = vector.load %arg2[%c0_11, %c0_12] : memref<32x32xf32, #tpu.memory_space<vmem>>, vector<32x32xf32>
      tpu.vector_store %arg2[%c0_11, %c0_12], %13 {strides = array<i32>} : memref<32x32xf32, #tpu.memory_space<vmem>>, vector<32x32xf32>,
    } else {
    }
    return
  }
  func.func @transform_0(%arg0: i32) -> (i32, i32) {
    %c0_i32 = arith.constant 0 : i32
    %c0_i32_0 = arith.constant 0 : i32
    return %arg0, %c0_i32 : i32, i32
  }
  func.func @transform_1(%arg0: i32) -> (i32, i32) {
    %c0_i32 = arith.constant 0 : i32
    %c0_i32_0 = arith.constant 0 : i32
    %c0_i32_1 = arith.constant 0 : i32
    return %c0_i32, %c0_i32_0 : i32, i32
  }
}

</mosaic_0001>

<llo_original>
// kernel: tpu_custom_call.1
$region0: #{tpu_custom_call.1}
  #allocation0 [shape = 'u32[]', space=smem, size = 0x4, offset = 0x4, fixed_abs, tag = 'smem constant byte address 0x4 - core index']
  #allocation1 [shape = 'u32[144,128]{1,0:T(1,128)}', space=vmem, size = 0x12000, scoped, tag = 'internal scratch']
  #allocation2 [shape = 'f32[32,32]{1,0:T(8,128)}', space=vmem, size = 0x4000, scoped, tag = 'scratch operand']
  %s0 = inlined_call_operand.hbm [shape: f32[16,32], index: 0, kind: input, shape index: {}]
  %s1 = inlined_call_operand.hbm [shape: f32[32,32], index: 1, kind: output, shape index: {}]
  %s2 = sld [smem:[#allocation0]]
  $region26: #{tpu_custom_call.1} parent=0
    _
  %s4 = ssub.s32 1, %s2
  %s5 = scalar_select 0, %s4, %s2
  $region1: #{tpu_custom_call.1} parent=0
    #allocation3 [shape = 'u8[8192]{0}', space=vmem, size = 0x2000, scoped, tag = 'input window, operand 0, single buffered']
    #allocation4 [shape = 's32[1]{0}', space=sflag, size = 0x4, scoped, tag = 'scoped memory for tpu_custom_call.1']
    #allocation5 [shape = 's32[1]{0}', space=sflag, size = 0x4, scoped, tag = 'scoped memory for tpu_custom_call.1']
    #allocation6 [shape = 'u8[16384]{0}', space=vmem, size = 0x4000, scoped, tag = 'output window, operand 0, single buffered']
    %6 = vsyncpa [#allocation4], 0
    %7 = vsyncpa [#allocation5], 0
    // Predicated region
    $region2: #{tpu_custom_call.1} parent=1 // pred_check
      _
    $region3: #{tpu_custom_call.1} parent=1 // pred_check_branch
      %9 = sbr.rel (0) target = $region5
    $region4: #{tpu_custom_call.1} parent=1 // pred_region
      %s11 = ssub.s32 256, 256
      %12 = vsyncadd [#allocation4], %s11
      %s13 = sshll.u32 [#allocation3], 4
      %s14 = int_to_ptr.vmem [resolvable:$true] %s13
      %19 = dma.hbm_to_vmem [thread:$0]  %s0, 256, %s14, [#allocation4], 128, 128, 8
    $region5: #{tpu_custom_call.1} parent=1 // pred_fallthru
      _
    // Predicated region
    $region6: #{tpu_custom_call.1} parent=1 // pred_check
      _
    $region7: #{tpu_custom_call.1} parent=1 // pred_check_branch
      %21 = sbr.rel (0) target = $region9
    $region8: #{tpu_custom_call.1} parent=1 // pred_region
      %22 = dma.done [#allocation4], 256
    $region9: #{tpu_custom_call.1} parent=1 // pred_fallthru
      _
    %p23 = scmp.eq.s32.totalorder 0, 0
    // Predicated region
    $region10: #{tpu_custom_call.1} parent=1 // pred_check
      %p24 = pneg %p23
    $region11: #{tpu_custom_call.1} parent=1 // pred_check_branch
      %26 = sbr.rel (%p24) target = $region13
    $region12: #{tpu_custom_call.1} parent=1 // pred_region
      %vm27 = vcmask 261120
      %28 = vst.msk [vmem:[#allocation2] sm:$0xff] %vm27, 0.0
      %29 = vst.msk [vmem:[#allocation2 + $0x8] sm:$0xff] %vm27, 0.0
      %30 = vst.msk [vmem:[#allocation2 + $0x10] sm:$0xff] %vm27, 0.0
      %31 = vst.msk [vmem:[#allocation2 + $0x18] sm:$0xff] %vm27, 0.0
    $region13: #{tpu_custom_call.1} parent=1 // pred_fallthru
      _
    %v32 = vld [vmem:[#allocation3] sm:$0xff]
    %v33 = vld [vmem:[#allocation3 + $0x8] sm:$0xff]
    %v34 = vld [vmem:[#allocation2] sm:$0xff]
    %v35 = vld [vmem:[#allocation2 + $0x8] sm:$0xff]
    %v36 = vld [vmem:[#allocation2 + $0x10] sm:$0xff]
    %v37 = vld [vmem:[#allocation2 + $0x18] sm:$0xff]
    %38 = vxpose.xlu0.b32.start [1/16] %v32, 128
    %39 = vxpose.xlu0.b32.cont [2/16] %v33, 128
    %40 = vxpose.xlu0.b32.cont [3/16] 0.0, 128
    %41 = vxpose.xlu0.b32.cont [4/16] 0.0, 128
    %42 = vxpose.xlu0.b32.cont [5/16] 0.0, 128
    %43 = vxpose.xlu0.b32.cont [6/16] 0.0, 128
    %44 = vxpose.xlu0.b32.cont [7/16] 0.0, 128
    %45 = vxpose.xlu0.b32.cont [8/16] 0.0, 128
    %46 = vxpose.xlu0.b32.cont [9/16] 0.0, 128
    %47 = vxpose.xlu0.b32.cont [10/16] 0.0, 128
    %48 = vxpose.xlu0.b32.cont [11/16] 0.0, 128
    %49 = vxpose.xlu0.b32.cont [12/16] 0.0, 128
    %50 = vxpose.xlu0.b32.cont [13/16] 0.0, 128
    %51 = vxpose.xlu0.b32.cont [14/16] 0.0, 128
    %52 = vxpose.xlu0.b32.cont [15/16] 0.0, 128
    %53 = vxpose.xlu0.b32.end [16/16] 0.0, 128
    %v54 = vpop.trf.xlu0
    %v55 = vpop.trf.xlu0
    %v56 = vpop.trf.xlu0
    %v57 = vpop.trf.xlu0
    %v58 = vpop.trf.xlu0
    %v59 = vpop.trf.xlu0
    %v60 = vpop.trf.xlu0
    %v61 = vpop.trf.xlu0
    %v62 = vpop.trf.xlu0
    %v63 = vpop.trf.xlu0
    %v64 = vpop.trf.xlu0
    %v65 = vpop.trf.xlu0
    %v66 = vpop.trf.xlu0
    %v67 = vpop.trf.xlu0
    %v68 = vpop.trf.xlu0
    %v69 = vpop.trf.xlu0
    %vm70 = vcmask 130048
    %v72 = vsel %vm70, %v54, 0
    %v75 = vsel %vm70, %v55, 0
    %v78 = vsel %vm70, %v56, 0
    %v81 = vsel %vm70, %v57, 0
    %83 = vmatprep.subr.mxu0 0.0
    %84 = vmatpush1.msra.mxu0 %v32
    %85 = vmatprep.subr.mxu0 0.0
    %86 = vmatpush1.msra.mxu0 %v33
    %87 = vmatprep.subr.mxu0 0.0
    %88 = vmatpush1.msra.mxu0 0.0
    %89 = vmatprep.subr.mxu0 0.0
    %90 = vmatpush1.msra.mxu0 0.0
    %91 = vmatprep.subr.mxu0 0.0
    %92 = vmatpush1.msra.mxu0 0.0
    %93 = vmatprep.subr.mxu0 0.0
    %94 = vmatpush1.msra.mxu0 0.0
    %95 = vmatprep.subr.mxu0 0.0
    %96 = vmatpush1.msra.mxu0 0.0
    %97 = vmatprep.subr.mxu0 0.0
    %98 = vmatpush1.msra.mxu0 0.0
    %99 = vmatprep.subr.mxu0 0.0
    %100 = vmatpush1.msra.mxu0 0.0
    %101 = vmatprep.subr.mxu0 0.0
    %102 = vmatpush1.msra.mxu0 0.0
    %103 = vmatprep.subr.mxu0 0.0
    %104 = vmatpush1.msra.mxu0 0.0
    %105 = vmatprep.subr.mxu0 0.0
    %106 = vmatpush1.msra.mxu0 0.0
    %107 = vmatprep.subr.mxu0 0.0
    %108 = vmatpush1.msra.mxu0 0.0
    %109 = vmatprep.subr.mxu0 0.0
    %110 = vmatpush1.msra.mxu0 0.0
    %111 = vmatprep.subr.mxu0 0.0
    %112 = vmatpush1.msra.mxu0 0.0
    %113 = vmatprep.subr.mxu0 0.0
    %114 = vmatpush1.msra.mxu0 0.0
    %115 = vmatprep.subr.mxu0 0.0
    %116 = vmatpush1.msra.mxu0 0.0
    %117 = vmatprep.subr.mxu0 0.0
    %118 = vmatpush1.msra.mxu0 0.0
    %119 = vmatprep.subr.mxu0 0.0
    %120 = vmatpush1.msra.mxu0 0.0
    %121 = vmatprep.subr.mxu0 0.0
    %122 = vmatpush1.msra.mxu0 0.0
    %123 = vmatprep.subr.mxu0 0.0
    %124 = vmatpush1.msra.mxu0 0.0
    %125 = vmatprep.subr.mxu0 0.0
    %126 = vmatpush1.msra.mxu0 0.0
    %127 = vmatprep.subr.mxu0 0.0
    %128 = vmatpush1.msra.mxu0 0.0
    %129 = vmatprep.subr.mxu0 0.0
    %130 = vmatpush1.msra.mxu0 0.0
    %131 = vmatprep.subr.mxu0 0.0
    %132 = vmatpush1.msra.mxu0 0.0
    %133 = vmatprep.subr.mxu0 0.0
    %134 = vmatpush1.msra.mxu0 0.0
    %135 = vmatprep.subr.mxu0 0.0
    %136 = vmatpush1.msra.mxu0 0.0
    %137 = vmatprep.subr.mxu0 0.0
    %138 = vmatpush1.msra.mxu0 0.0
    %139 = vmatprep.subr.mxu0 0.0
    %140 = vmatpush1.msra.mxu0 0.0
    %141 = vmatprep.subr.mxu0 0.0
    %142 = vmatpush1.msra.mxu0 0.0
    %143 = vmatprep.subr.mxu0 0.0
    %144 = vmatpush1.msra.mxu0 0.0
    %145 = vmatprep.subr.mxu0 0.0
    %146 = vmatpush1.msra.mxu0 0.0
    %147 = vmatprep.mubr.f32.mxu0 0.0
    %148 = vmatmul.mubr.f32.gmra.mrb[0].mxu0 %v72
    %v149 = vpop.f32.mrb[0].mxu0
    %v150 = vadd.f32 0.0, %v149
    %v151 = vpop.f32.mrb[0].mxu0
    %152 = vmatprep.mubr.f32.mxu0 0.0
    %153 = vmatmul.mubr.f32.gmra.mrb[0].mxu0 %v75
    %v154 = vpop.f32.mrb[0].mxu0
    %v155 = vadd.f32 0.0, %v154
    %v156 = vpop.f32.mrb[0].mxu0
    %157 = vmatprep.mubr.f32.mxu0 0.0
    %158 = vmatmul.mubr.f32.gmra.mrb[0].mxu0 %v78
    %v159 = vpop.f32.mrb[0].mxu0
    %v160 = vadd.f32 0.0, %v159
    %v161 = vpop.f32.mrb[0].mxu0
    %162 = vmatprep.mubr.f32.mxu0 0.0
    %163 = vmatmul.mubr.f32.gmra.mrb[0].mxu0 %v81
    %v164 = vpop.f32.mrb[0].mxu0
    %v165 = vadd.f32 0.0, %v164
    %v166 = vpop.f32.mrb[0].mxu0
    %167 = vdwg.mxu0
    %v168 = vadd.f32 %v34, %v150
    %v169 = vadd.f32 %v35, %v155
    %v170 = vadd.f32 %v36, %v160
    %v171 = vadd.f32 %v37, %v165
    %vm172 = vcmask 261120
    %173 = vst.msk [vmem:[#allocation2] sm:$0xff] %vm172, %v168
    %174 = vst.msk [vmem:[#allocation2 + $0x8] sm:$0xff] %vm172, %v169
    %175 = vst.msk [vmem:[#allocation2 + $0x10] sm:$0xff] %vm172, %v170
    %176 = vst.msk [vmem:[#allocation2 + $0x18] sm:$0xff] %vm172, %v171
    // Predicated region
    $region14: #{tpu_custom_call.1} parent=1 // pred_check
      %p177 = pneg %p23
    $region15: #{tpu_custom_call.1} parent=1 // pred_check_branch
      %179 = sbr.rel (%p177) target = $region17
    $region16: #{tpu_custom_call.1} parent=1 // pred_region
      %v180 = vld [vmem:[#allocation2] sm:$0xff]
      %v181 = vld [vmem:[#allocation2 + $0x8] sm:$0xff]
      %v182 = vld [vmem:[#allocation2 + $0x10] sm:$0xff]
      %v183 = vld [vmem:[#allocation2 + $0x18] sm:$0xff]
      %v184 = vmul.f32 %v180, 0.0625
      %v185 = vmul.f32 %v181, 0.0625
      %v186 = vmul.f32 %v182, 0.0625
      %v187 = vmul.f32 %v183, 0.0625
      %188 = vst.msk [vmem:[#allocation6] sm:$0xff] %vm172, %v184
      %189 = vst.msk [vmem:[#allocation6 + $0x8] sm:$0xff] %vm172, %v185
      %190 = vst.msk [vmem:[#allocation6 + $0x10] sm:$0xff] %vm172, %v186
      %191 = vst.msk [vmem:[#allocation6 + $0x18] sm:$0xff] %vm172, %v187
    $region17: #{tpu_custom_call.1} parent=1 // pred_fallthru
      _
    // Predicated region
    $region18: #{tpu_custom_call.1} parent=1 // pred_check
      _
    $region19: #{tpu_custom_call.1} parent=1 // pred_check_branch
      %193 = sbr.rel (0) target = $region21
    $region20: #{tpu_custom_call.1} parent=1 // pred_region
      %s195 = ssub.s32 512, 512
      %196 = vsyncadd [#allocation5], %s195
      %s197 = sshll.u32 [#allocation6], 4
      %s198 = int_to_ptr.vmem [resolvable:$true] %s197
      %203 = dma.vmem_to_hbm [thread:$0]  %s198, 512, %s1, [#allocation5], 128, 128, 8
    $region21: #{tpu_custom_call.1} parent=1 // pred_fallthru
      _
    // Predicated region
    $region22: #{tpu_custom_call.1} parent=1 // pred_check
      _
    $region23: #{tpu_custom_call.1} parent=1 // pred_check_branch
      %205 = sbr.rel (0) target = $region25
    $region24: #{tpu_custom_call.1} parent=1 // pred_region
      %206 = dma.done [#allocation5], 512
    $region25: #{tpu_custom_call.1} parent=1 // pred_fallthru
      _
    %207 = vsyncpa [#allocation4], 1
    %208 = vsyncpa [#allocation5], 1

</llo_original>
